<compile_context>
chip_gen: v7x
topology: tpu7x:2x2x1
jax: 0.10.0
libtpu: 0.0.40
codegen_flags: <defaults>
</compile_context>

<pallas_src>
import functools
import math

import jax
import jax.numpy as jnp
from jax.experimental import pallas as pl
from jax.experimental.pallas import tpu as pltpu


def _round_up(v, m):
    return (v + m - 1) // m * m


def _rgcn_conv_kernel(a_ref, et_ref, x_ref, w_ref, b_ref, o_ref, h_ref, *,
                      apply_relu):
    """Grid = (row_tile i [parallel], relation r [arbitrary], k-tile [arbitrary]).

    a_ref/et_ref: (TM, TK)   bf16 / int32 adjacency tile + edge-type tile
    x_ref:        (TK, Cin)  bf16
    w_ref:        (Cin, Cout) f32 (relation dim squeezed)
    b_ref:        (1, Cout)  f32
    o_ref:        (TM, Cout) f32 -- resident across (r, k), accumulated in place
    h_ref:        (TM, Cin)  f32 scratch -- per-relation (A∘M_r)@x partial
    """
    r = pl.program_id(1)
    k = pl.program_id(2)
    last_r = pl.num_programs(1) - 1
    last_k = pl.num_programs(2) - 1

    @pl.when(jnp.logical_and(r == 0, k == 0))
    def _():
        o_ref[...] = jnp.zeros_like(o_ref)

    @pl.when(k == 0)
    def _():
        h_ref[...] = jnp.zeros_like(h_ref)

    # Masked adjacency for this relation: single select instead of cmp+cast+mul.
    a = a_ref[...]
    rel_adj = jnp.where(et_ref[...] == r, a, jnp.zeros_like(a))

    # Accumulate (A ∘ M_r) @ x over the K (=N) contraction tiles in f32.
    h_ref[...] += jnp.dot(rel_adj, x_ref[...],
                          preferred_element_type=jnp.float32)

    # Once the contraction for this relation is complete, apply W[r] and add
    # into the resident output block.
    @pl.when(k == last_k)
    def _():
        o_ref[...] += jnp.dot(h_ref[...], w_ref[...],
                              preferred_element_type=jnp.float32)

    # Finalize: bias add (+ optional fused relu) on the very last relation.
    @pl.when(jnp.logical_and(r == last_r, k == last_k))
    def _():
        out = o_ref[...] + b_ref[...]
        if apply_relu:
            out = jnp.maximum(out, 0.0)
        o_ref[...] = out


def rgcn_conv(x, A, edge_type, weight, bias, *, activation=None,
              compute_dtype=jnp.bfloat16, tm=256, tk=512):
    """One RGCNConv layer (dense-adjacency path).

    x: (N, C_in) f32, A: (N, N) f32, edge_type: (N, N) int,
    weight: (R, C_in, C_out) f32, bias: (C_out,) f32  ->  (N, C_out) f32.
    """
    N, C_in = x.shape
    R, _, C_out = weight.shape

    # Lane-dense channel padding (multiple of 128) and node padding so the
    # row / contraction tiles divide evenly.
    c_in_p = _round_up(C_in, 128)
    c_out_p = _round_up(C_out, 128)
    n128 = _round_up(N, 128)
    tm = min(tm, n128)
    tk = min(tk, n128)
    n_pad = _round_up(N, math.lcm(tm, tk))
    dn = n_pad - N

    a_p = jnp.pad(A, ((0, dn), (0, dn))).astype(compute_dtype)
    et_p = jnp.pad(edge_type.astype(jnp.int32), ((0, dn), (0, dn)),
                   constant_values=-1)           # -1 never matches a relation
    x_p = jnp.pad(x, ((0, dn), (0, c_in_p - C_in))).astype(compute_dtype)
    w_p = jnp.pad(weight, ((0, 0), (0, c_in_p - C_in),
                           (0, c_out_p - C_out))).astype(jnp.float32)
    b_p = jnp.pad(bias.reshape(1, -1),
                  ((0, 0), (0, c_out_p - C_out))).astype(jnp.float32)

    grid = (n_pad // tm, R, n_pad // tk)
    kernel = functools.partial(_rgcn_conv_kernel,
                               apply_relu=(activation == "relu"))

    out_p = pl.pallas_call(
        kernel,
        out_shape=jax.ShapeDtypeStruct((n_pad, c_out_p), jnp.float32),
        grid_spec=pltpu.PrefetchScalarGridSpec(
            num_scalar_prefetch=0,
            grid=grid,
            in_specs=[
                pl.BlockSpec((tm, tk), lambda i, r, k: (i, k)),        # A
                pl.BlockSpec((tm, tk), lambda i, r, k: (i, k)),        # edge_type
                pl.BlockSpec((tk, c_in_p), lambda i, r, k: (k, 0)),    # x
                pl.BlockSpec((pl.Squeezed(), c_in_p, c_out_p),
                             lambda i, r, k: (r, 0, 0)),               # W[rel]
                pl.BlockSpec((1, c_out_p), lambda i, r, k: (0, 0)),    # bias
            ],
            out_specs=pl.BlockSpec((tm, c_out_p), lambda i, r, k: (i, 0)),
            scratch_shapes=[pltpu.VMEM((tm, c_in_p), jnp.float32)],
        ),
        compiler_params=pltpu.CompilerParams(
            dimension_semantics=("parallel", "arbitrary", "arbitrary"),
            vmem_limit_bytes=48 * 1024 * 1024,   # headroom under v7x's 64 MiB
        ),
    )(a_p, et_p, x_p, w_p, b_p)

    return out_p[:N, :C_out]


def rgcn_forward(embed, A, edge_type, w1, b1, w2, b2):
    """Full RGCN forward: conv1 -> relu -> conv2 -> log_softmax."""
    # x = self.embed.weight (whole table, no gather needed)
    x = rgcn_conv(embed, A, edge_type, w1, b1, activation="relu")
    x = rgcn_conv(x, A, edge_type, w2, b2)
    # TODO(synk): log_softmax is a trivial per-row epilogue left to XLA; the
    # num_bases / num_blocks weight-factorization paths are wrapper-side
    # precomputation glue, and a scalar-prefetch CSR formulation for genuinely
    # sparse graphs is a structural follow-up.
    return jax.nn.log_softmax(x, axis=1)


# ----------------------------- pure-JAX reference ---------------------------

def _hi(a, b):
    return jnp.dot(a, b, precision=jax.lax.Precision.HIGHEST)


def rgcn_conv_reference(x, A, edge_type, weight, bias):
    R = weight.shape[0]
    out = jnp.zeros((x.shape[0], weight.shape[2]), jnp.float32)
    for rel in range(R):
        rel_adj = jnp.where(edge_type == rel, A, 0.0)
        out = out + _hi(_hi(rel_adj, x), weight[rel])
    return out + bias


def rgcn_reference(embed, A, edge_type, w1, b1, w2, b2):
    x = rgcn_conv_reference(embed, A, edge_type, w1, b1)
    x = jnp.maximum(x, 0.0)
    x = rgcn_conv_reference(x, A, edge_type, w2, b2)
    return jax.nn.log_softmax(x, axis=1)


def _xavier_uniform(key, shape, dtype=jnp.float32):
    fan_in, fan_out = shape[-2], shape[-1]
    limit = (6.0 / (fan_in + fan_out)) ** 0.5
    return jax.random.uniform(key, shape, dtype, minval=-limit, maxval=limit)


if __name__ == "__main__":
    # Small deterministic example: num_entities=32, hidden=16 (per module),
    # num_relations=3, num_classes=8. Dense (N,N) adjacency + edge-type maps.
    N_ENT, N_REL, N_CLS, HID = 32, 3, 8, 16

    key = jax.random.PRNGKey(0)
    k_emb, k_a, k_e, k_w1, k_b1, k_w2, k_b2 = jax.random.split(key, 7)

    embed = jax.random.normal(k_emb, (N_ENT, HID), jnp.float32)
    A = 0.1 * jax.random.uniform(k_a, (N_ENT, N_ENT), jnp.float32)
    edge_type = jax.random.randint(k_e, (N_ENT, N_ENT), 0, N_REL).astype(jnp.int32)

    w1 = _xavier_uniform(k_w1, (N_REL, HID, HID))
    b1 = 0.1 * jax.random.normal(k_b1, (HID,), jnp.float32)
    w2 = _xavier_uniform(k_w2, (N_REL, HID, N_CLS))
    b2 = 0.1 * jax.random.normal(k_b2, (N_CLS,), jnp.float32)

    # Layer-level check (bias + fused relu path), then full-model check.
    out1 = jax.block_until_ready(
        rgcn_conv(embed, A, edge_type, w1, b1, activation="relu"))
    ref1 = jnp.maximum(rgcn_conv_reference(embed, A, edge_type, w1, b1), 0.0)
    assert out1.shape == (N_ENT, HID)
    # bf16 A/x operands -> relaxed tolerance vs the f32 reference.
    assert jnp.allclose(out1, ref1, atol=1e-2, rtol=1e-2), "conv1 mismatch"

    out = jax.block_until_ready(rgcn_forward(embed, A, edge_type, w1, b1, w2, b2))
    ref = rgcn_reference(embed, A, edge_type, w1, b1, w2, b2)
    assert out.shape == (N_ENT, N_CLS)
    assert jnp.allclose(out, ref, atol=2e-2, rtol=2e-2), "forward mismatch"

    print("KERNEL_OK")
</pallas_src>

<mosaic_0001>
module attributes {stable_mosaic.version = 11 : i64} {
  func.func @_rgcn_conv_kernel(%arg0: i32, %arg1: i32, %arg2: i32, %arg3: memref<128x128xbf16, #tpu.memory_space<vmem>>, %arg4: memref<128x128xi32, #tpu.memory_space<vmem>>, %arg5: memref<128x128xbf16, #tpu.memory_space<vmem>>, %arg6: memref<1x128x128xf32, #tpu.memory_space<vmem>>, %arg7: memref<1x128xf32, #tpu.memory_space<vmem>>, %arg8: memref<128x128xf32, #tpu.memory_space<vmem>>, %arg9: memref<128x128xf32, #tpu.memory_space<vmem>>) attributes {dimension_semantics = [#tpu.dimension_semantics<parallel>, #tpu.dimension_semantics<arbitrary>, #tpu.dimension_semantics<arbitrary>], iteration_bounds = array<i64: 1, 3, 1>, scalar_prefetch = 0 : i64, scratch_operands = 1 : i64, tpu.core_type = #tpu.core_type<tc>, window_params = [{transform_indices = @transform_0, window_bounds = array<i64: 128, 128>}, {transform_indices = @transform_1, window_bounds = array<i64: 128, 128>}, {transform_indices = @transform_2, window_bounds = array<i64: 128, 128>}, {transform_indices = @transform_3, window_bounds = array<i64: 1, 128, 128>}, {pipeline_mode = #tpu.pipeline_mode<synchronous>, transform_indices = @transform_4, window_bounds = array<i64: 1, 128>}, {transform_indices = @transform_5, window_bounds = array<i64: 128, 128>}]} {
    %c0_i32 = arith.constant 0 : i32
    %0 = arith.cmpi eq, %arg1, %c0_i32 : i32
    %c0_i32_0 = arith.constant 0 : i32
    %1 = arith.cmpi eq, %arg2, %c0_i32_0 : i32
    %2 = arith.andi %0, %1 : i1
    %3 = arith.extui %2 : i1 to i32
    %c0_i32_1 = arith.constant 0 : i32
    %4 = arith.cmpi ne, %3, %c0_i32_1 : i32
    scf.if %4 {
      %cst_18 = arith.constant 0.000000e+00 : f32
      %27 = vector.broadcast %cst_18 : f32 to vector<128x128xf32>
      %c0_19 = arith.constant 0 : index
      %c0_20 = arith.constant 0 : index
      %28 = vector.load %arg8[%c0_19, %c0_20] : memref<128x128xf32, #tpu.memory_space<vmem>>, vector<128x128xf32>
      tpu.vector_store %arg8[%c0_19, %c0_20], %27 {strides = array<i32>} : memref<128x128xf32, #tpu.memory_space<vmem>>, vector<128x128xf32>,
    } else {
    }
    %c0_i32_2 = arith.constant 0 : i32
    %5 = arith.cmpi eq, %arg2, %c0_i32_2 : i32
    %6 = arith.extui %5 : i1 to i32
    %c0_i32_3 = arith.constant 0 : i32
    %7 = arith.cmpi ne, %6, %c0_i32_3 : i32
    scf.if %7 {
      %cst_18 = arith.constant 0.000000e+00 : f32
      %27 = vector.broadcast %cst_18 : f32 to vector<128x128xf32>
      %c0_19 = arith.constant 0 : index
      %c0_20 = arith.constant 0 : index
      %28 = vector.load %arg9[%c0_19, %c0_20] : memref<128x128xf32, #tpu.memory_space<vmem>>, vector<128x128xf32>
      tpu.vector_store %arg9[%c0_19, %c0_20], %27 {strides = array<i32>} : memref<128x128xf32, #tpu.memory_space<vmem>>, vector<128x128xf32>,
    } else {
    }
    %c0 = arith.constant 0 : index
    %c0_4 = arith.constant 0 : index
    %8 = vector.load %arg3[%c0, %c0_4] : memref<128x128xbf16, #tpu.memory_space<vmem>>, vector<128x128xbf16>
    %c0_5 = arith.constant 0 : index
    %c0_6 = arith.constant 0 : index
    %9 = vector.load %arg4[%c0_5, %c0_6] : memref<128x128xi32, #tpu.memory_space<vmem>>, vector<128x128xi32>
    %10 = vector.broadcast %arg1 : i32 to vector<128x128xi32>
    %11 = arith.cmpi eq, %9, %10 : vector<128x128xi32>
    %cst = arith.constant 0.000000e+00 : bf16
    %12 = vector.broadcast %cst : bf16 to vector<128x128xbf16>
    %13 = arith.select %11, %8, %12 : vector<128x128xi1>, vector<128x128xbf16>
    %c0_7 = arith.constant 0 : index
    %c0_8 = arith.constant 0 : index
    %14 = vector.load %arg9[%c0_7, %c0_8] : memref<128x128xf32, #tpu.memory_space<vmem>>, vector<128x128xf32>
    %c0_9 = arith.constant 0 : index
    %c0_10 = arith.constant 0 : index
    %15 = vector.load %arg5[%c0_9, %c0_10] : memref<128x128xbf16, #tpu.memory_space<vmem>>, vector<128x128xbf16>
    %cst_11 = arith.constant dense<0.000000e+00> : vector<128x128xf32>
    %16 = tpu.matmul %13, %15, %cst_11 {dimension_numbers = #tpu.dot_dimension_numbers<[1], [0], [0], [1], [0, 0, 1, 1], [], []>} : vector<128x128xbf16>, vector<128x128xbf16>, vector<128x128xf32> -> vector<128x128xf32>
    %17 = arith.addf %14, %16 : vector<128x128xf32>
    %c0_12 = arith.constant 0 : index
    %c0_13 = arith.constant 0 : index
    %18 = vector.load %arg9[%c0_12, %c0_13] : memref<128x128xf32, #tpu.memory_space<vmem>>, vector<128x128xf32>
    tpu.vector_store %arg9[%c0_12, %c0_13], %17 {strides = array<i32>} : memref<128x128xf32, #tpu.memory_space<vmem>>, vector<128x128xf32>,
    %c0_i32_14 = arith.constant 0 : i32
    %19 = arith.cmpi eq, %arg2, %c0_i32_14 : i32
    %20 = arith.extui %19 : i1 to i32
    %c0_i32_15 = arith.constant 0 : i32
    %21 = arith.cmpi ne, %20, %c0_i32_15 : i32
    scf.if %21 {
      %c0_18 = arith.constant 0 : index
      %c0_19 = arith.constant 0 : index
      %27 = vector.load %arg8[%c0_18, %c0_19] : memref<128x128xf32, #tpu.memory_space<vmem>>, vector<128x128xf32>
      %c0_20 = arith.constant 0 : index
      %c0_21 = arith.constant 0 : index
      %28 = vector.load %arg9[%c0_20, %c0_21] : memref<128x128xf32, #tpu.memory_space<vmem>>, vector<128x128xf32>
      %c0_22 = arith.constant 0 : index
      %c0_23 = arith.constant 0 : index
      %c0_24 = arith.constant 0 : index
      %29 = vector.load %arg6[%c0_22, %c0_23, %c0_24] : memref<1x128x128xf32, #tpu.memory_space<vmem>>, vector<1x128x128xf32>
      %30 = vector.shape_cast %29 : vector<1x128x128xf32> to vector<128x128xf32>
      %cst_25 = arith.constant dense<0.000000e+00> : vector<128x128xf32>
      %31 = tpu.matmul %28, %30, %cst_25 {dimension_numbers = #tpu.dot_dimension_numbers<[1], [0], [0], [1], [0, 0, 1, 1], [], []>} : vector<128x128xf32>, vector<128x128xf32>, vector<128x128xf32> -> vector<128x128xf32>
      %32 = arith.addf %27, %31 : vector<128x128xf32>
      %c0_26 = arith.constant 0 : index
      %c0_27 = arith.constant 0 : index
      %33 = vector.load %arg8[%c0_26, %c0_27] : memref<128x128xf32, #tpu.memory_space<vmem>>, vector<128x128xf32>
      tpu.vector_store %arg8[%c0_26, %c0_27], %32 {strides = array<i32>} : memref<128x128xf32, #tpu.memory_space<vmem>>, vector<128x128xf32>,
    } else {
    }
    %c2_i32 = arith.constant 2 : i32
    %22 = arith.cmpi eq, %arg1, %c2_i32 : i32
    %c0_i32_16 = arith.constant 0 : i32
    %23 = arith.cmpi eq, %arg2, %c0_i32_16 : i32
    %24 = arith.andi %22, %23 : i1
    %25 = arith.extui %24 : i1 to i32
    %c0_i32_17 = arith.constant 0 : i32
    %26 = arith.cmpi ne, %25, %c0_i32_17 : i32
    scf.if %26 {
      %c0_18 = arith.constant 0 : index
      %c0_19 = arith.constant 0 : index
      %27 = vector.load %arg8[%c0_18, %c0_19] : memref<128x128xf32, #tpu.memory_space<vmem>>, vector<128x128xf32>
      %c0_20 = arith.constant 0 : index
      %c0_21 = arith.constant 0 : index
      %28 = vector.load %arg7[%c0_20, %c0_21] : memref<1x128xf32, #tpu.memory_space<vmem>>, vector<1x128xf32>
      %29 = vector.broadcast %28 : vector<1x128xf32> to vector<128x128xf32>
      %30 = arith.addf %27, %29 : vector<128x128xf32>
      %cst_22 = arith.constant 0.000000e+00 : f32
      %31 = vector.broadcast %cst_22 : f32 to vector<128x128xf32>
      %32 = arith.maximumf %30, %31 : vector<128x128xf32>
      %c0_23 = arith.constant 0 : index
      %c0_24 = arith.constant 0 : index
      %33 = vector.load %arg8[%c0_23, %c0_24] : memref<128x128xf32, #tpu.memory_space<vmem>>, vector<128x128xf32>
      tpu.vector_store %arg8[%c0_23, %c0_24], %32 {strides = array<i32>} : memref<128x128xf32, #tpu.memory_space<vmem>>, vector<128x128xf32>,
    } else {
    }
    return
  }
  func.func @transform_0(%arg0: i32, %arg1: i32, %arg2: i32) -> (i32, i32) {
    %c0_i32 = arith.constant 0 : i32
    return %arg0, %arg2 : i32, i32
  }
  func.func @transform_1(%arg0: i32, %arg1: i32, %arg2: i32) -> (i32, i32) {
    %c0_i32 = arith.constant 0 : i32
    return %arg0, %arg2 : i32, i32
  }
  func.func @transform_2(%arg0: i32, %arg1: i32, %arg2: i32) -> (i32, i32) {
    %c0_i32 = arith.constant 0 : i32
    %c0_i32_0 = arith.constant 0 : i32
    return %arg2, %c0_i32 : i32, i32
  }
  func.func @transform_3(%arg0: i32, %arg1: i32, %arg2: i32) -> (i32, i32, i32) {
    %c0_i32 = arith.constant 0 : i32
    %c0_i32_0 = arith.constant 0 : i32
    %c0_i32_1 = arith.constant 0 : i32
    return %arg1, %c0_i32, %c0_i32_0 : i32, i32, i32
  }
  func.func @transform_4(%arg0: i32, %arg1: i32, %arg2: i32) -> (i32, i32) {
    %c0_i32 = arith.constant 0 : i32
    %c0_i32_0 = arith.constant 0 : i32
    %c0_i32_1 = arith.constant 0 : i32
    return %c0_i32, %c0_i32_0 : i32, i32
  }
  func.func @transform_5(%arg0: i32, %arg1: i32, %arg2: i32) -> (i32, i32) {
    %c0_i32 = arith.constant 0 : i32
    %c0_i32_0 = arith.constant 0 : i32
    return %arg0, %c0_i32 : i32, i32
  }
}

</mosaic_0001>

<llo_original>
// kernel: tpu_custom_call.1
$region0: #{tpu_custom_call.1}
  #allocation0 [shape = 'u32[]', space=smem, size = 0x4, offset = 0x4, fixed_abs, tag = 'smem constant byte address 0x4 - core index']
  #allocation1 [shape = 'u32[144,128]{1,0:T(1,128)}', space=vmem, size = 0x12000, scoped, tag = 'internal scratch']
  #allocation2 [shape = 'f32[128,128]{1,0:T(8,128)}', space=vmem, size = 0x10000, scoped, tag = 'scratch operand']
  %s0 = inlined_call_operand.hbm [shape: bf16[128,128], index: 0, kind: input, shape index: {}]
  %s1 = inlined_call_operand.hbm [shape: s32[128,128], index: 1, kind: input, shape index: {}]
  %s2 = inlined_call_operand.hbm [shape: bf16[128,128], index: 2, kind: input, shape index: {}]
  %s3 = inlined_call_operand.hbm [shape: f32[3,128,128], index: 3, kind: input, shape index: {}]
  %s4 = inlined_call_operand.vmem [shape: f32[1,128], index: 4, kind: input, shape index: {}]
  %s5 = inlined_call_operand.hbm [shape: f32[128,128], index: 5, kind: output, shape index: {}]
  %s6 = sld [smem:[#allocation0]]
  $region85: #{tpu_custom_call.1} parent=0
    _
  %s8 = ssub.s32 1, %s6
  %s9 = scalar_select 0, %s8, %s6
  $region1: #{tpu_custom_call.1} parent=0
    #allocation3 [shape = 'u8[32768]{0}', space=vmem, size = 0x8000, scoped, tag = 'input window, operand 0, single buffered']
    #allocation4 [shape = 's32[2]{0}', space=sflag, size = 0x8, scoped, tag = 'scoped memory for tpu_custom_call.1']
    #allocation5 [shape = 's32[2]{0}', space=sflag, size = 0x8, scoped, tag = 'scoped memory for tpu_custom_call.1']
    #allocation6 [shape = 'u8[65536]{0}', space=vmem, size = 0x10000, scoped, tag = 'input window, operand 1, single buffered']
    #allocation7 [shape = 's32[1]{0}', space=sflag, size = 0x4, scoped, tag = 'scoped memory for tpu_custom_call.1']
    #allocation8 [shape = 'u8[32768]{0}', space=vmem, size = 0x8000, scoped, tag = 'input window, operand 2, single buffered']
    #allocation9 [shape = 'u8[131072]{0}', space=vmem, size = 0x20000, scoped, tag = 'input window, operand 3']
    #allocation10 [shape = 's32[2]{0}', space=sflag, size = 0x8, scoped, tag = 'scoped memory for tpu_custom_call.1']
    #allocation11 [shape = 'u8[65536]{0}', space=vmem, size = 0x10000, scoped, tag = 'output window, operand 0, single buffered']
    %10 = vsyncpa [#allocation4], 0
    %11 = vsyncpa [#allocation7], 0
    %12 = vsyncpa [#allocation10], 0
    %s13 = scalar_lea.sflag [#allocation10], 1
    %14 = vsyncpa %s13, 0
    %15 = vsyncpa [#allocation5], 0
    loop: start=0, step=1, limit=5
    $region2: #{tpu_custom_call.1} parent=1 // loop_pre_header
      _
    $region3: #{tpu_custom_call.1} parent=1 // loop_header
      %s17 = sphi 0, %s21
      %p18 = scmp.ge.s32.totalorder %s17, 5
      %s24 = sphi 0, %s43
      %s25 = sphi 0, %s39
      %s26 = sphi 0, %s35
      %s27 = sphi 0, %s24
      %s28 = sphi 0, %s25
      %s29 = sphi 0, %s26
      %s30 = sphi 0, %s27
      %s31 = sphi 0, %s28
      %s32 = sphi 0, %s29
      %s48 = sphi 0, %s50
      %s51 = sphi 0, %s48
      %s52 = sphi 0, %s51
      %s68 = sphi 0, %s52
      %s76 = sphi 0, %s78
      %s79 = sphi 0, %s76
      %s80 = sphi 0, %s79
      %s96 = sphi 0, %s80
      %s102 = sphi 0, %s104
      %s105 = sphi 0, %s102
      %s106 = sphi 0, %s105
      %s122 = sphi 0, %s106
      %s128 = sphi 0, %s130
      %s131 = sphi 0, %s128
      %s132 = sphi 0, %s131
      %s148 = sphi 0, %s132
      %s152 = sphi 0, %s152
      %s154 = sphi 0, %s152
      %s155 = sphi 0, %s154
      %s169 = sphi 0, %s155
      %s175 = sphi 0, %s177
      %s178 = sphi 0, %s175
      %s179 = sphi 0, %s178
      %s195 = sphi 0, %s179
    $region4: #{tpu_custom_call.1} parent=1 // loop_header_branch
      %20 = sbr.rel (%p18) target = $region8
    $region5: #{tpu_custom_call.1} parent=1 // loop_body
      %s22 = ssub.s32 %s17, 1
      %s23 = ssub.s32 %s17, 2
      %s33 = sadd.s32 1, %s26
      %p34 = scmp.ge.s32.totalorder %s33, 1
      %s35 = scalar_select %p34, 0, %s33
      %s36 = sadd.s32 1, %s25
      %s37 = scalar_select %p34, %s36, %s25
      %p38 = scmp.ge.s32.totalorder %s37, 3
      %s39 = scalar_select %p38, 0, %s37
      %s40 = sadd.s32 1, %s24
      %s41 = scalar_select %p38, %s40, %s24
      %p42 = scmp.ge.s32.totalorder %s41, 1
      %s43 = scalar_select %p42, 0, %s41
      %s44 = ssub.s32 %s24, %s43
      %s45 = ssub.s32 %s26, %s35
      %s46 = sor.u32 %s44, %s45
      %p47 = scmp.eq.s32.totalorder %s46, 0
      %s49 = sadd.s32 %s48, 1
      %s50 = scalar_select %p47, %s48, %s49
      %p53 = pneg %p47
      %p54 = scmp.eq.s32.totalorder %s17, 2
      %p55 = por %p53, %p54
      %p56 = scmp.ne.s32.totalorder %s48, %s51
      %p57 = scmp.eq.s32.totalorder %s17, 0
      %p58 = por %p56, %p57
      %p59 = scmp.ne.s32.totalorder %s48, %s51
      %p60 = scmp.eq.s32.totalorder %s22, 2
      %p61 = por %p59, %p60
      %p62 = scmp.ne.s32.totalorder %s51, %s52
      %p63 = scmp.eq.s32.totalorder %s22, 0
      %p64 = por %p62, %p63
      %p65 = scmp.ne.s32.totalorder %s51, %s52
      %p66 = scmp.eq.s32.totalorder %s23, 2
      %p67 = por %p65, %p66
      %p69 = scmp.ne.s32.totalorder %s52, %s68
      %p70 = scmp.eq.s32.totalorder %s23, 0
      %p71 = por %p69, %p70
      %s72 = ssub.s32 %s24, %s43
      %s73 = ssub.s32 %s26, %s35
      %s74 = sor.u32 %s72, %s73
      %p75 = scmp.eq.s32.totalorder %s74, 0
      %s77 = sadd.s32 %s76, 1
      %s78 = scalar_select %p75, %s76, %s77
      %p81 = pneg %p75
      %p82 = scmp.eq.s32.totalorder %s17, 2
      %p83 = por %p81, %p82
      %p84 = scmp.ne.s32.totalorder %s76, %s79
      %p85 = scmp.eq.s32.totalorder %s17, 0
      %p86 = por %p84, %p85
      %p87 = scmp.ne.s32.totalorder %s76, %s79
      %p88 = scmp.eq.s32.totalorder %s22, 2
      %p89 = por %p87, %p88
      %p90 = scmp.ne.s32.totalorder %s79, %s80
      %p91 = scmp.eq.s32.totalorder %s22, 0
      %p92 = por %p90, %p91
      %p93 = scmp.ne.s32.totalorder %s79, %s80
      %p94 = scmp.eq.s32.totalorder %s23, 2
      %p95 = por %p93, %p94
      %p97 = scmp.ne.s32.totalorder %s80, %s96
      %p98 = scmp.eq.s32.totalorder %s23, 0
      %p99 = por %p97, %p98
      %s100 = ssub.s32 %s26, %s35
      %p101 = scmp.eq.s32.totalorder %s100, 0
      %s103 = sadd.s32 %s102, 1
      %s104 = scalar_select %p101, %s102, %s103
      %p107 = pneg %p101
      %p108 = scmp.eq.s32.totalorder %s17, 2
      %p109 = por %p107, %p108
      %p110 = scmp.ne.s32.totalorder %s102, %s105
      %p111 = scmp.eq.s32.totalorder %s17, 0
      %p112 = por %p110, %p111
      %p113 = scmp.ne.s32.totalorder %s102, %s105
      %p114 = scmp.eq.s32.totalorder %s22, 2
      %p115 = por %p113, %p114
      %p116 = scmp.ne.s32.totalorder %s105, %s106
      %p117 = scmp.eq.s32.totalorder %s22, 0
      %p118 = por %p116, %p117
      %p119 = scmp.ne.s32.totalorder %s105, %s106
      %p120 = scmp.eq.s32.totalorder %s23, 2
      %p121 = por %p119, %p120
      %p123 = scmp.ne.s32.totalorder %s106, %s122
      %p124 = scmp.eq.s32.totalorder %s23, 0
      %p125 = por %p123, %p124
      %s126 = ssub.s32 %s25, %s39
      %p127 = scmp.eq.s32.totalorder %s126, 0
      %s129 = sadd.s32 %s128, 1
      %s130 = scalar_select %p127, %s128, %s129
      %p133 = pneg %p127
      %p134 = scmp.eq.s32.totalorder %s17, 2
      %p135 = por %p133, %p134
      %p136 = scmp.ne.s32.totalorder %s128, %s131
      %p137 = scmp.eq.s32.totalorder %s17, 0
      %p138 = por %p136, %p137
      %p139 = scmp.ne.s32.totalorder %s128, %s131
      %p140 = scmp.eq.s32.totalorder %s22, 2
      %p141 = por %p139, %p140
      %p142 = scmp.ne.s32.totalorder %s131, %s132
      %p143 = scmp.eq.s32.totalorder %s22, 0
      %p144 = por %p142, %p143
      %p145 = scmp.ne.s32.totalorder %s131, %s132
      %p146 = scmp.eq.s32.totalorder %s23, 2
      %p147 = por %p145, %p146
      %p149 = scmp.ne.s32.totalorder %s132, %s148
      %p150 = scmp.eq.s32.totalorder %s23, 0
      %p151 = por %p149, %p150
      %s153 = sadd.s32 %s152, 1
      %p156 = scmp.eq.s32.totalorder %s17, 2
      %p157 = scmp.ne.s32.totalorder %s152, %s154
      %p158 = scmp.eq.s32.totalorder %s17, 0
      %p159 = por %p157, %p158
      %p160 = scmp.ne.s32.totalorder %s152, %s154
      %p161 = scmp.eq.s32.totalorder %s22, 2
      %p162 = por %p160, %p161
      %p163 = scmp.ne.s32.totalorder %s154, %s155
      %p164 = scmp.eq.s32.totalorder %s22, 0
      %p165 = por %p163, %p164
      %p166 = scmp.ne.s32.totalorder %s154, %s155
      %p167 = scmp.eq.s32.totalorder %s23, 2
      %p168 = por %p166, %p167
      %p170 = scmp.ne.s32.totalorder %s155, %s169
      %p171 = scmp.eq.s32.totalorder %s23, 0
      %p172 = por %p170, %p171
      %s173 = ssub.s32 %s24, %s43
      %p174 = scmp.eq.s32.totalorder %s173, 0
      %s176 = sadd.s32 %s175, 1
      %s177 = scalar_select %p174, %s175, %s176
      %p180 = pneg %p174
      %p181 = scmp.eq.s32.totalorder %s17, 2
      %p182 = por %p180, %p181
      %p183 = scmp.ne.s32.totalorder %s175, %s178
      %p184 = scmp.eq.s32.totalorder %s17, 0
      %p185 = por %p183, %p184
      %p186 = scmp.ne.s32.totalorder %s175, %s178
      %p187 = scmp.eq.s32.totalorder %s22, 2
      %p188 = por %p186, %p187
      %p189 = scmp.ne.s32.totalorder %s178, %s179
      %p190 = scmp.eq.s32.totalorder %s22, 0
      %p191 = por %p189, %p190
      %p192 = scmp.ne.s32.totalorder %s178, %s179
      %p193 = scmp.eq.s32.totalorder %s23, 2
      %p194 = por %p192, %p193
      %p196 = scmp.ne.s32.totalorder %s179, %s195
      %p197 = scmp.eq.s32.totalorder %s23, 0
      %p198 = por %p196, %p197
      %p199 = scmp.le.s32.totalorder 1, %s17
      %p200 = scmp.lt.s32.totalorder %s17, 4
      %p201 = pnand %p199, %p200
      %p202 = pneg %p201
      // Predicated region
      $region9: #{tpu_custom_call.1} parent=5 // pred_check
        _
      $region10: #{tpu_custom_call.1} parent=5 // pred_check_branch
        %204 = sbr.rel (%p201) target = $region12
      $region11: #{tpu_custom_call.1} parent=5 // pred_region
        %s205 = ssub.s32 %s17, 1
        // Predicated region
        $region13: #{tpu_custom_call.1} parent=11 // pred_check
          %p206 = pneg %p64
        $region14: #{tpu_custom_call.1} parent=11 // pred_check_branch
          %208 = sbr.rel (%p206) target = $region16
        $region15: #{tpu_custom_call.1} parent=11 // pred_region
          %s209 = smul.u32 16, %s27
          %s211 = ssub.s32 1024, 1024
          %212 = vsyncadd [#allocation4], %s211
          %s213 = sadd.s32 %s29, %s209
          %s214 = smul.addr %s213, 64
          %s215 = scalar_lea.hbm %s0, %s214
          %s216 = sshll.u32 [#allocation3], 4
          %s217 = int_to_ptr.vmem [resolvable:$true] %s216
          %222 = dma.hbm_to_vmem [thread:$0]  %s215, 1024, %s217, [#allocation4], 64, 64, 4
        $region16: #{tpu_custom_call.1} parent=11 // pred_fallthru
          _
        // Predicated region
        $region17: #{tpu_custom_call.1} parent=11 // pred_check
          %p223 = pneg %p92
        $region18: #{tpu_custom_call.1} parent=11 // pred_check_branch
          %225 = sbr.rel (%p223) target = $region20
        $region19: #{tpu_custom_call.1} parent=11 // pred_region
          %s226 = smul.u32 16, %s27
          %s228 = ssub.s32 2048, 2048
          %229 = vsyncadd [#allocation7], %s228
          %s230 = sadd.s32 %s29, %s226
          %s231 = smul.addr %s230, 128
          %s232 = scalar_lea.hbm %s1, %s231
          %s233 = sshll.u32 [#allocation6], 4
          %s234 = int_to_ptr.vmem [resolvable:$true] %s233
          %239 = dma.hbm_to_vmem [thread:$0]  %s232, 2048, %s234, [#allocation7], 128, 128, 8
        $region20: #{tpu_custom_call.1} parent=11 // pred_fallthru
          _
        // Predicated region
        $region21: #{tpu_custom_call.1} parent=11 // pred_check
          %p240 = pneg %p118
        $region22: #{tpu_custom_call.1} parent=11 // pred_check_branch
          %242 = sbr.rel (%p240) target = $region24
        $region23: #{tpu_custom_call.1} parent=11 // pred_region
          %s243 = smul.u32 16, %s29
          %s245 = ssub.s32 1024, 1024
          %246 = vsyncadd [#allocation7], %s245
          %s247 = smul.addr %s243, 64
          %s248 = scalar_lea.hbm %s2, %s247
          %s249 = sshll.u32 [#allocation8], 4
          %s250 = int_to_ptr.vmem [resolvable:$true] %s249
          %255 = dma.hbm_to_vmem [thread:$0]  %s248, 1024, %s250, [#allocation7], 64, 64, 4
        $region24: #{tpu_custom_call.1} parent=11 // pred_fallthru
          _
        // Predicated region
        $region25: #{tpu_custom_call.1} parent=11 // pred_check
          %p256 = pneg %p165
        $region26: #{tpu_custom_call.1} parent=11 // pred_check_branch
          %258 = sbr.rel (%p256) target = $region28
        $region27: #{tpu_custom_call.1} parent=11 // pred_region
          _
        $region28: #{tpu_custom_call.1} parent=11 // pred_fallthru
          _
      $region12: #{tpu_custom_call.1} parent=5 // pred_fallthru
        _
      %p259 = scmp.lt.s32.totalorder %s17, 3
      // Predicated region
      $region29: #{tpu_custom_call.1} parent=5 // pred_check
        %p260 = pneg %p259
      $region30: #{tpu_custom_call.1} parent=5 // pred_check_branch
        %262 = sbr.rel (%p260) target = $region32
      $region31: #{tpu_custom_call.1} parent=5 // pred_region
        // Predicated region
        $region33: #{tpu_custom_call.1} parent=31 // pred_check
          %p263 = pneg %p138
        $region34: #{tpu_custom_call.1} parent=31 // pred_check_branch
          %265 = sbr.rel (%p263) target = $region36
        $region35: #{tpu_custom_call.1} parent=31 // pred_region
          %s266 = sand.u32 %s128, 1
          %s267 = scalar_lea.sflag [#allocation10], %s266
          %s268 = sand.u32 %s128, 1
          %s269 = smul.addr %s268, 128
          %s270 = scalar_lea.vmem [#allocation9], %s269
          %s272 = ssub.s32 2048, 2048
          %273 = vsyncadd %s267, %s272
          %s274 = smul.addr %s25, 16
          %s275 = smul.addr %s274, 128
          %s276 = scalar_lea.hbm %s3, %s275
          %s277 = sshll.u32 %s270, 4
          %s278 = int_to_ptr.vmem [resolvable:$true] %s277
          %283 = dma.hbm_to_vmem [thread:$0]  %s276, 2048, %s278, %s267, 128, 128, 8
        $region36: #{tpu_custom_call.1} parent=31 // pred_fallthru
          _
      $region32: #{tpu_custom_call.1} parent=5 // pred_fallthru
        _
      %p284 = scmp.le.s32.totalorder 1, %s17
      %p285 = scmp.lt.s32.totalorder %s17, 4
      %p286 = pnand %p284, %p285
      %p287 = pneg %p286
      // Predicated region
      $region37: #{tpu_custom_call.1} parent=5 // pred_check
        _
      $region38: #{tpu_custom_call.1} parent=5 // pred_check_branch
        %289 = sbr.rel (%p286) target = $region40
      $region39: #{tpu_custom_call.1} parent=5 // pred_region
        %s290 = ssub.s32 %s17, 1
        // Predicated region
        $region41: #{tpu_custom_call.1} parent=39 // pred_check
          %p291 = pneg %p64
        $region42: #{tpu_custom_call.1} parent=39 // pred_check_branch
          %293 = sbr.rel (%p291) target = $region44
        $region43: #{tpu_custom_call.1} parent=39 // pred_region
          %294 = dma.done [#allocation4], 1024
        $region44: #{tpu_custom_call.1} parent=39 // pred_fallthru
          _
        // Predicated region
        $region45: #{tpu_custom_call.1} parent=39 // pred_check
          %p295 = pneg %p92
        $region46: #{tpu_custom_call.1} parent=39 // pred_check_branch
          %297 = sbr.rel (%p295) target = $region48
        $region47: #{tpu_custom_call.1} parent=39 // pred_region
          %298 = dma.done [#allocation7], 2048
        $region48: #{tpu_custom_call.1} parent=39 // pred_fallthru
          _
        // Predicated region
        $region49: #{tpu_custom_call.1} parent=39 // pred_check
          %p299 = pneg %p118
        $region50: #{tpu_custom_call.1} parent=39 // pred_check_branch
          %301 = sbr.rel (%p299) target = $region52
        $region51: #{tpu_custom_call.1} parent=39 // pred_region
          %302 = dma.done [#allocation7], 1024
        $region52: #{tpu_custom_call.1} parent=39 // pred_fallthru
          _
        %s303 = sand.u32 %s131, 1
        %s304 = scalar_lea.sflag [#allocation10], %s303
        %s305 = sand.u32 %s131, 1
        %s306 = smul.addr %s305, 128
        %s307 = scalar_lea.vmem [#allocation9], %s306
        // Predicated region
        $region53: #{tpu_custom_call.1} parent=39 // pred_check
          %p308 = pneg %p144
        $region54: #{tpu_custom_call.1} parent=39 // pred_check_branch
          %310 = sbr.rel (%p308) target = $region56
        $region55: #{tpu_custom_call.1} parent=39 // pred_region
          %311 = dma.done %s304, 2048
        $region56: #{tpu_custom_call.1} parent=39 // pred_fallthru
          _
        %p312 = pneg %p64
        %p313 = pneg %p61
        %p314 = pneg %p92
        %p315 = pneg %p89
        %p316 = pneg %p118
        %p317 = pneg %p115
        %s318 = sand.u32 %s131, 1
        %s319 = scalar_lea.sflag [#allocation10], %s318
        %s320 = sand.u32 %s131, 1
        %s321 = smul.addr %s320, 128
        %s322 = scalar_lea.vmem [#allocation9], %s321
        %p323 = pneg %p144
        %p324 = pneg %p141
        %p325 = pneg %p165
        %p326 = pneg %p162
        %p327 = pneg %p191
        %p328 = pneg %p188
        %s329 = smul.u32 16, %s27
        %s330 = smul.u32 16, %s27
        %s331 = smul.u32 16, %s29
        %s332 = smul.u32 16, %s27
        %p334 = scmp.eq.s32.totalorder %s28, 0
        %p335 = scmp.eq.s32.totalorder %s29, 0
        %p336 = pnand %p334, %p335
        %p337 = pneg %p336
        // Predicated region
        $region57: #{tpu_custom_call.1} parent=39 // pred_check
          _
        $region58: #{tpu_custom_call.1} parent=39 // pred_check_branch
          %339 = sbr.rel (%p336) target = $region60
        $region59: #{tpu_custom_call.1} parent=39 // pred_region
          %340 = vst [vmem:[#allocation11] sm:$0xff] 0.0
          %341 = vst [vmem:[#allocation11 + $0x8] sm:$0xff] 0.0
          %342 = vst [vmem:[#allocation11 + $0x10] sm:$0xff] 0.0
          %343 = vst [vmem:[#allocation11 + $0x18] sm:$0xff] 0.0
          %344 = vst [vmem:[#allocation11 + $0x20] sm:$0xff] 0.0
          %345 = vst [vmem:[#allocation11 + $0x28] sm:$0xff] 0.0
          %346 = vst [vmem:[#allocation11 + $0x30] sm:$0xff] 0.0
          %347 = vst [vmem:[#allocation11 + $0x38] sm:$0xff] 0.0
          %348 = vst [vmem:[#allocation11 + $0x40] sm:$0xff] 0.0
          %349 = vst [vmem:[#allocation11 + $0x48] sm:$0xff] 0.0
          %350 = vst [vmem:[#allocation11 + $0x50] sm:$0xff] 0.0
          %351 = vst [vmem:[#allocation11 + $0x58] sm:$0xff] 0.0
          %352 = vst [vmem:[#allocation11 + $0x60] sm:$0xff] 0.0
          %353 = vst [vmem:[#allocation11 + $0x68] sm:$0xff] 0.0
          %354 = vst [vmem:[#allocation11 + $0x70] sm:$0xff] 0.0
          %355 = vst [vmem:[#allocation11 + $0x78] sm:$0xff] 0.0
        $region60: #{tpu_custom_call.1} parent=39 // pred_fallthru
          _
        // Predicated region
        $region61: #{tpu_custom_call.1} parent=39 // pred_check
          %p356 = pneg %p335
        $region62: #{tpu_custom_call.1} parent=39 // pred_check_branch
          %358 = sbr.rel (%p356) target = $region64
        $region63: #{tpu_custom_call.1} parent=39 // pred_region
          %359 = vst [vmem:[#allocation2] sm:$0xff] 0.0
          %360 = vst [vmem:[#allocation2 + $0x8] sm:$0xff] 0.0
          %361 = vst [vmem:[#allocation2 + $0x10] sm:$0xff] 0.0
          %362 = vst [vmem:[#allocation2 + $0x18] sm:$0xff] 0.0
          %363 = vst [vmem:[#allocation2 + $0x20] sm:$0xff] 0.0
          %364 = vst [vmem:[#allocation2 + $0x28] sm:$0xff] 0.0
          %365 = vst [vmem:[#allocation2 + $0x30] sm:$0xff] 0.0
          %366 = vst [vmem:[#allocation2 + $0x38] sm:$0xff] 0.0
          %367 = vst [vmem:[#allocation2 + $0x40] sm:$0xff] 0.0
          %368 = vst [vmem:[#allocation2 + $0x48] sm:$0xff] 0.0
          %369 = vst [vmem:[#allocation2 + $0x50] sm:$0xff] 0.0
          %370 = vst [vmem:[#allocation2 + $0x58] sm:$0xff] 0.0
          %371 = vst [vmem:[#allocation2 + $0x60] sm:$0xff] 0.0
          %372 = vst [vmem:[#allocation2 + $0x68] sm:$0xff] 0.0
          %373 = vst [vmem:[#allocation2 + $0x70] sm:$0xff] 0.0
          %374 = vst [vmem:[#allocation2 + $0x78] sm:$0xff] 0.0
        $region64: #{tpu_custom_call.1} parent=39 // pred_fallthru
          _
        %v375 = vld [vmem:[#allocation3] sm:$0xf]
        %v376 = vld [vmem:[#allocation3 + $0x4] sm:$0xf]
        %v377 = vld [vmem:[#allocation3 + $0x8] sm:$0xf]
        %v378 = vld [vmem:[#allocation3 + $0xc] sm:$0xf]
        %v379 = vld [vmem:[#allocation3 + $0x10] sm:$0xf]
        %v380 = vld [vmem:[#allocation3 + $0x14] sm:$0xf]
        %v381 = vld [vmem:[#allocation3 + $0x18] sm:$0xf]
        %v382 = vld [vmem:[#allocation3 + $0x1c] sm:$0xf]
        %v383 = vld [vmem:[#allocation3 + $0x20] sm:$0xf]
        %v384 = vld [vmem:[#allocation3 + $0x24] sm:$0xf]
        %v385 = vld [vmem:[#allocation3 + $0x28] sm:$0xf]
        %v386 = vld [vmem:[#allocation3 + $0x2c] sm:$0xf]
        %v387 = vld [vmem:[#allocation3 + $0x30] sm:$0xf]
        %v388 = vld [vmem:[#allocation3 + $0x34] sm:$0xf]
        %v389 = vld [vmem:[#allocation3 + $0x38] sm:$0xf]
        %v390 = vld [vmem:[#allocation3 + $0x3c] sm:$0xf]
        %v391 = vld [vmem:[#allocation6] sm:$0xff]
        %v392 = vld [vmem:[#allocation6 + $0x8] sm:$0xff]
        %v393 = vld [vmem:[#allocation6 + $0x10] sm:$0xff]
        %v394 = vld [vmem:[#allocation6 + $0x18] sm:$0xff]
        %v395 = vld [vmem:[#allocation6 + $0x20] sm:$0xff]
        %v396 = vld [vmem:[#allocation6 + $0x28] sm:$0xff]
        %v397 = vld [vmem:[#allocation6 + $0x30] sm:$0xff]
        %v398 = vld [vmem:[#allocation6 + $0x38] sm:$0xff]
        %v399 = vld [vmem:[#allocation6 + $0x40] sm:$0xff]
        %v400 = vld [vmem:[#allocation6 + $0x48] sm:$0xff]
        %v401 = vld [vmem:[#allocation6 + $0x50] sm:$0xff]
        %v402 = vld [vmem:[#allocation6 + $0x58] sm:$0xff]
        %v403 = vld [vmem:[#allocation6 + $0x60] sm:$0xff]
        %v404 = vld [vmem:[#allocation6 + $0x68] sm:$0xff]
        %v405 = vld [vmem:[#allocation6 + $0x70] sm:$0xff]
        %v406 = vld [vmem:[#allocation6 + $0x78] sm:$0xff]
        %v407 = vstv %s28
        %vm408 = vcmp.eq.s32.totalorder %v391, %v407
        %vm409 = vcmp.eq.s32.totalorder %v392, %v407
        %vm410 = vcmp.eq.s32.totalorder %v393, %v407
        %vm411 = vcmp.eq.s32.totalorder %v394, %v407
        %vm412 = vcmp.eq.s32.totalorder %v395, %v407
        %vm413 = vcmp.eq.s32.totalorder %v396, %v407
        %vm414 = vcmp.eq.s32.totalorder %v397, %v407
        %vm415 = vcmp.eq.s32.totalorder %v398, %v407
        %vm416 = vcmp.eq.s32.totalorder %v399, %v407
        %vm417 = vcmp.eq.s32.totalorder %v400, %v407
        %vm418 = vcmp.eq.s32.totalorder %v401, %v407
        %vm419 = vcmp.eq.s32.totalorder %v402, %v407
        %vm420 = vcmp.eq.s32.totalorder %v403, %v407
        %vm421 = vcmp.eq.s32.totalorder %v404, %v407
        %vm422 = vcmp.eq.s32.totalorder %v405, %v407
        %vm423 = vcmp.eq.s32.totalorder %v406, %v407
        %vm424 = vmpackc.low %vm408, %vm408
        %vm425 = vmpackc.low %vm409, %vm409
        %vm426 = vmpackc.low %vm410, %vm410
        %vm427 = vmpackc.low %vm411, %vm411
        %vm428 = vmpackc.low %vm412, %vm412
        %vm429 = vmpackc.low %vm413, %vm413
        %vm430 = vmpackc.low %vm414, %vm414
        %vm431 = vmpackc.low %vm415, %vm415
        %vm432 = vmpackc.low %vm416, %vm416
        %vm433 = vmpackc.low %vm417, %vm417
        %vm434 = vmpackc.low %vm418, %vm418
        %vm435 = vmpackc.low %vm419, %vm419
        %vm436 = vmpackc.low %vm420, %vm420
        %vm437 = vmpackc.low %vm421, %vm421
        %vm438 = vmpackc.low %vm422, %vm422
        %vm439 = vmpackc.low %vm423, %vm423
        %v440 = vsel %vm424, %v375, 0
        %v441 = vsel %vm425, %v376, 0
        %v442 = vsel %vm426, %v377, 0
        %v443 = vsel %vm427, %v378, 0
        %v444 = vsel %vm428, %v379, 0
        %v445 = vsel %vm429, %v380, 0
        %v446 = vsel %vm430, %v381, 0
        %v447 = vsel %vm431, %v382, 0
        %v448 = vsel %vm432, %v383, 0
        %v449 = vsel %vm433, %v384, 0
        %v450 = vsel %vm434, %v385, 0
        %v451 = vsel %vm435, %v386, 0
        %v452 = vsel %vm436, %v387, 0
        %v453 = vsel %vm437, %v388, 0
        %v454 = vsel %vm438, %v389, 0
        %v455 = vsel %vm439, %v390, 0
        %v456 = vld [vmem:[#allocation2] sm:$0xff]
        %v457 = vld [vmem:[#allocation2 + $0x8] sm:$0xff]
        %v458 = vld [vmem:[#allocation2 + $0x10] sm:$0xff]
        %v459 = vld [vmem:[#allocation2 + $0x18] sm:$0xff]
        %v460 = vld [vmem:[#allocation2 + $0x20] sm:$0xff]
        %v461 = vld [vmem:[#allocation2 + $0x28] sm:$0xff]
        %v462 = vld [vmem:[#allocation2 + $0x30] sm:$0xff]
        %v463 = vld [vmem:[#allocation2 + $0x38] sm:$0xff]
        %v464 = vld [vmem:[#allocation2 + $0x40] sm:$0xff]
        %v465 = vld [vmem:[#allocation2 + $0x48] sm:$0xff]
        %v466 = vld [vmem:[#allocation2 + $0x50] sm:$0xff]
        %v467 = vld [vmem:[#allocation2 + $0x58] sm:$0xff]
        %v468 = vld [vmem:[#allocation2 + $0x60] sm:$0xff]
        %v469 = vld [vmem:[#allocation2 + $0x68] sm:$0xff]
        %v470 = vld [vmem:[#allocation2 + $0x70] sm:$0xff]
        %v471 = vld [vmem:[#allocation2 + $0x78] sm:$0xff]
        %v472 = vld [vmem:[#allocation8] sm:$0xf]
        %v473 = vld [vmem:[#allocation8 + $0x4] sm:$0xf]
        %v474 = vld [vmem:[#allocation8 + $0x8] sm:$0xf]
        %v475 = vld [vmem:[#allocation8 + $0xc] sm:$0xf]
        %v476 = vld [vmem:[#allocation8 + $0x10] sm:$0xf]
        %v477 = vld [vmem:[#allocation8 + $0x14] sm:$0xf]
        %v478 = vld [vmem:[#allocation8 + $0x18] sm:$0xf]
        %v479 = vld [vmem:[#allocation8 + $0x1c] sm:$0xf]
        %v480 = vld [vmem:[#allocation8 + $0x20] sm:$0xf]
        %v481 = vld [vmem:[#allocation8 + $0x24] sm:$0xf]
        %v482 = vld [vmem:[#allocation8 + $0x28] sm:$0xf]
        %v483 = vld [vmem:[#allocation8 + $0x2c] sm:$0xf]
        %v484 = vld [vmem:[#allocation8 + $0x30] sm:$0xf]
        %v485 = vld [vmem:[#allocation8 + $0x34] sm:$0xf]
        %v486 = vld [vmem:[#allocation8 + $0x38] sm:$0xf]
        %v487 = vld [vmem:[#allocation8 + $0x3c] sm:$0xf]
        %v504 = vunpack.c.l.b16 %v440
        %v505 = vunpack.c.l.b16 %v441
        %v506 = vunpack.c.l.b16 %v442
        %v507 = vunpack.c.l.b16 %v443
        %v508 = vunpack.c.l.b16 %v444
        %v509 = vunpack.c.l.b16 %v445
        %v510 = vunpack.c.l.b16 %v446
        %v511 = vunpack.c.l.b16 %v447
        %v512 = vunpack.c.l.b16 %v448
        %v513 = vunpack.c.l.b16 %v449
        %v514 = vunpack.c.l.b16 %v450
        %v515 = vunpack.c.l.b16 %v451
        %v516 = vunpack.c.l.b16 %v452
        %v517 = vunpack.c.l.b16 %v453
        %v518 = vunpack.c.l.b16 %v454
        %v519 = vunpack.c.l.b16 %v455
        %v520 = vpack.c.b16 %v505, %v504
        %v521 = vpack.c.b16 %v507, %v506
        %v522 = vpack.c.b16 %v509, %v508
        %v523 = vpack.c.b16 %v511, %v510
        %v524 = vpack.c.b16 %v513, %v512
        %v525 = vpack.c.b16 %v515, %v514
        %v526 = vpack.c.b16 %v517, %v516
        %v527 = vpack.c.b16 %v519, %v518
        %v552 = vunpack.c.l.b16 %v472
        %v553 = vunpack.c.l.b16 %v473
        %v554 = vunpack.c.l.b16 %v474
        %v555 = vunpack.c.l.b16 %v475
        %v556 = vunpack.c.l.b16 %v476
        %v557 = vunpack.c.l.b16 %v477
        %v558 = vunpack.c.l.b16 %v478
        %v559 = vunpack.c.l.b16 %v479
        %v560 = vunpack.c.l.b16 %v480
        %v561 = vunpack.c.l.b16 %v481
        %v562 = vunpack.c.l.b16 %v482
        %v563 = vunpack.c.l.b16 %v483
        %v564 = vunpack.c.l.b16 %v484
        %v565 = vunpack.c.l.b16 %v485
        %v566 = vunpack.c.l.b16 %v486
        %v567 = vunpack.c.l.b16 %v487
        %v568 = vpack.c.b16 %v553, %v552
        %v569 = vpack.c.b16 %v555, %v554
        %v570 = vpack.c.b16 %v557, %v556
        %v571 = vpack.c.b16 %v559, %v558
        %v572 = vpack.c.b16 %v561, %v560
        %v573 = vpack.c.b16 %v563, %v562
        %v574 = vpack.c.b16 %v565, %v564
        %v575 = vpack.c.b16 %v567, %v566
        %584 = vmatprep.subr.bf16.mxu0 0
        %585 = vmatpush1.bf16.msra.mxu0 %v568
        %586 = vmatprep.subr.bf16.mxu0 0
        %587 = vmatpush1.bf16.msra.mxu0 %v569
        %588 = vmatprep.subr.bf16.mxu0 0
        %589 = vmatpush1.bf16.msra.mxu0 %v570
        %590 = vmatprep.subr.bf16.mxu0 0
        %591 = vmatpush1.bf16.msra.mxu0 %v571
        %592 = vmatprep.subr.bf16.mxu0 0
        %593 = vmatpush1.bf16.msra.mxu0 %v572
        %594 = vmatprep.subr.bf16.mxu0 0
        %595 = vmatpush1.bf16.msra.mxu0 %v573
        %596 = vmatprep.subr.bf16.mxu0 0
        %597 = vmatpush1.bf16.msra.mxu0 %v574
        %598 = vmatprep.subr.bf16.mxu0 0
        %599 = vmatpush1.bf16.msra.mxu0 %v575
        %600 = vmatprep.subr.bf16.mxu0 0
        %601 = vmatpush1.bf16.msra.mxu0 0
        %602 = vmatprep.subr.bf16.mxu0 0
        %603 = vmatpush1.bf16.msra.mxu0 0
        %604 = vmatprep.subr.bf16.mxu0 0
        %605 = vmatpush1.bf16.msra.mxu0 0
        %606 = vmatprep.subr.bf16.mxu0 0
        %607 = vmatpush1.bf16.msra.mxu0 0
        %608 = vmatprep.subr.bf16.mxu0 0
        %609 = vmatpush1.bf16.msra.mxu0 0
        %610 = vmatprep.subr.bf16.mxu0 0
        %611 = vmatpush1.bf16.msra.mxu0 0
        %612 = vmatprep.subr.bf16.mxu0 0
        %613 = vmatpush1.bf16.msra.mxu0 0
        %614 = vmatprep.subr.bf16.mxu0 0
        %615 = vmatpush1.bf16.msra.mxu0 0
        %616 = vmatprep.mubr.bf16.mxu0 0
        %617 = vmatmul.mubr.bf16.gmra.mrb[0].mxu0 %v520
        %v618 = vpop.f32.mrb[0].mxu0
        %v619 = vadd.f32 0.0, %v618
        %v620 = vpop.f32.mrb[0].mxu0
        %v621 = vpop.f32.mrb[0].mxu0
        %v622 = vadd.f32 0.0, %v621
        %v623 = vpop.f32.mrb[0].mxu0
        %624 = vmatprep.mubr.bf16.mxu0 0
        %625 = vmatmul.mubr.bf16.gmra.mrb[0].mxu0 %v521
        %v626 = vpop.f32.mrb[0].mxu0
        %v627 = vadd.f32 0.0, %v626
        %v628 = vpop.f32.mrb[0].mxu0
        %v629 = vpop.f32.mrb[0].mxu0
        %v630 = vadd.f32 0.0, %v629
        %v631 = vpop.f32.mrb[0].mxu0
        %632 = vmatprep.mubr.bf16.mxu0 0
        %633 = vmatmul.mubr.bf16.gmra.mrb[0].mxu0 %v522
        %v634 = vpop.f32.mrb[0].mxu0
        %v635 = vadd.f32 0.0, %v634
        %v636 = vpop.f32.mrb[0].mxu0
        %v637 = vpop.f32.mrb[0].mxu0
        %v638 = vadd.f32 0.0, %v637
        %v639 = vpop.f32.mrb[0].mxu0
        %640 = vmatprep.mubr.bf16.mxu0 0
        %641 = vmatmul.mubr.bf16.gmra.mrb[0].mxu0 %v523
        %v642 = vpop.f32.mrb[0].mxu0
        %v643 = vadd.f32 0.0, %v642
        %v644 = vpop.f32.mrb[0].mxu0
        %v645 = vpop.f32.mrb[0].mxu0
        %v646 = vadd.f32 0.0, %v645
        %v647 = vpop.f32.mrb[0].mxu0
        %648 = vmatprep.mubr.bf16.mxu0 0
        %649 = vmatmul.mubr.bf16.gmra.mrb[0].mxu0 %v524
        %v650 = vpop.f32.mrb[0].mxu0
        %v651 = vadd.f32 0.0, %v650
        %v652 = vpop.f32.mrb[0].mxu0
        %v653 = vpop.f32.mrb[0].mxu0
        %v654 = vadd.f32 0.0, %v653
        %v655 = vpop.f32.mrb[0].mxu0
        %656 = vmatprep.mubr.bf16.mxu0 0
        %657 = vmatmul.mubr.bf16.gmra.mrb[0].mxu0 %v525
        %v658 = vpop.f32.mrb[0].mxu0
        %v659 = vadd.f32 0.0, %v658
        %v660 = vpop.f32.mrb[0].mxu0
        %v661 = vpop.f32.mrb[0].mxu0
        %v662 = vadd.f32 0.0, %v661
        %v663 = vpop.f32.mrb[0].mxu0
        %664 = vmatprep.mubr.bf16.mxu0 0
        %665 = vmatmul.mubr.bf16.gmra.mrb[0].mxu0 %v526
        %v666 = vpop.f32.mrb[0].mxu0
        %v667 = vadd.f32 0.0, %v666
        %v668 = vpop.f32.mrb[0].mxu0
        %v669 = vpop.f32.mrb[0].mxu0
        %v670 = vadd.f32 0.0, %v669
        %v671 = vpop.f32.mrb[0].mxu0
        %672 = vmatprep.mubr.bf16.mxu0 0
        %673 = vmatmul.mubr.bf16.gmra.mrb[0].mxu0 %v527
        %v674 = vpop.f32.mrb[0].mxu0
        %v675 = vadd.f32 0.0, %v674
        %v676 = vpop.f32.mrb[0].mxu0
        %v677 = vpop.f32.mrb[0].mxu0
        %v678 = vadd.f32 0.0, %v677
        %v679 = vpop.f32.mrb[0].mxu0
        %680 = vdwg.mxu0
        %v681 = vadd.f32 %v456, %v619
        %v682 = vadd.f32 %v457, %v622
        %v683 = vadd.f32 %v458, %v627
        %v684 = vadd.f32 %v459, %v630
        %v685 = vadd.f32 %v460, %v635
        %v686 = vadd.f32 %v461, %v638
        %v687 = vadd.f32 %v462, %v643
        %v688 = vadd.f32 %v463, %v646
        %v689 = vadd.f32 %v464, %v651
        %v690 = vadd.f32 %v465, %v654
        %v691 = vadd.f32 %v466, %v659
        %v692 = vadd.f32 %v467, %v662
        %v693 = vadd.f32 %v468, %v667
        %v694 = vadd.f32 %v469, %v670
        %v695 = vadd.f32 %v470, %v675
        %v696 = vadd.f32 %v471, %v678
        %697 = vst [vmem:[#allocation2] sm:$0xff] %v681
        %698 = vst [vmem:[#allocation2 + $0x8] sm:$0xff] %v682
        %699 = vst [vmem:[#allocation2 + $0x10] sm:$0xff] %v683
        %700 = vst [vmem:[#allocation2 + $0x18] sm:$0xff] %v684
        %701 = vst [vmem:[#allocation2 + $0x20] sm:$0xff] %v685
        %702 = vst [vmem:[#allocation2 + $0x28] sm:$0xff] %v686
        %703 = vst [vmem:[#allocation2 + $0x30] sm:$0xff] %v687
        %704 = vst [vmem:[#allocation2 + $0x38] sm:$0xff] %v688
        %705 = vst [vmem:[#allocation2 + $0x40] sm:$0xff] %v689
        %706 = vst [vmem:[#allocation2 + $0x48] sm:$0xff] %v690
        %707 = vst [vmem:[#allocation2 + $0x50] sm:$0xff] %v691
        %708 = vst [vmem:[#allocation2 + $0x58] sm:$0xff] %v692
        %709 = vst [vmem:[#allocation2 + $0x60] sm:$0xff] %v693
        %710 = vst [vmem:[#allocation2 + $0x68] sm:$0xff] %v694
        %711 = vst [vmem:[#allocation2 + $0x70] sm:$0xff] %v695
        %712 = vst [vmem:[#allocation2 + $0x78] sm:$0xff] %v696
        // Predicated region
        $region65: #{tpu_custom_call.1} parent=39 // pred_check
          %p713 = pneg %p335
        $region66: #{tpu_custom_call.1} parent=39 // pred_check_branch
          %715 = sbr.rel (%p713) target = $region68
        $region67: #{tpu_custom_call.1} parent=39 // pred_region
          %v716 = vld [vmem:[#allocation11] sm:$0xff]
          %v717 = vld [vmem:[#allocation11 + $0x8] sm:$0xff]
          %v718 = vld [vmem:[#allocation11 + $0x10] sm:$0xff]
          %v719 = vld [vmem:[#allocation11 + $0x18] sm:$0xff]
          %v720 = vld [vmem:[#allocation11 + $0x20] sm:$0xff]
          %v721 = vld [vmem:[#allocation11 + $0x28] sm:$0xff]
          %v722 = vld [vmem:[#allocation11 + $0x30] sm:$0xff]
          %v723 = vld [vmem:[#allocation11 + $0x38] sm:$0xff]
          %v724 = vld [vmem:[#allocation11 + $0x40] sm:$0xff]
          %v725 = vld [vmem:[#allocation11 + $0x48] sm:$0xff]
          %v726 = vld [vmem:[#allocation11 + $0x50] sm:$0xff]
          %v727 = vld [vmem:[#allocation11 + $0x58] sm:$0xff]
          %v728 = vld [vmem:[#allocation11 + $0x60] sm:$0xff]
          %v729 = vld [vmem:[#allocation11 + $0x68] sm:$0xff]
          %v730 = vld [vmem:[#allocation11 + $0x70] sm:$0xff]
          %v731 = vld [vmem:[#allocation11 + $0x78] sm:$0xff]
          %v732 = vld [vmem:[#allocation2] sm:$0xff]
          %v733 = vld [vmem:[#allocation2 + $0x8] sm:$0xff]
          %v734 = vld [vmem:[#allocation2 + $0x10] sm:$0xff]
          %v735 = vld [vmem:[#allocation2 + $0x18] sm:$0xff]
          %v736 = vld [vmem:[#allocation2 + $0x20] sm:$0xff]
          %v737 = vld [vmem:[#allocation2 + $0x28] sm:$0xff]
          %v738 = vld [vmem:[#allocation2 + $0x30] sm:$0xff]
          %v739 = vld [vmem:[#allocation2 + $0x38] sm:$0xff]
          %v740 = vld [vmem:[#allocation2 + $0x40] sm:$0xff]
          %v741 = vld [vmem:[#allocation2 + $0x48] sm:$0xff]
          %v742 = vld [vmem:[#allocation2 + $0x50] sm:$0xff]
          %v743 = vld [vmem:[#allocation2 + $0x58] sm:$0xff]
          %v744 = vld [vmem:[#allocation2 + $0x60] sm:$0xff]
          %v745 = vld [vmem:[#allocation2 + $0x68] sm:$0xff]
          %v746 = vld [vmem:[#allocation2 + $0x70] sm:$0xff]
          %v747 = vld [vmem:[#allocation2 + $0x78] sm:$0xff]
          %v748 = vld [vmem:[%s307] sm:$0xff]
          %v749 = vld [vmem:[%s307 + $0x8] sm:$0xff]
          %v750 = vld [vmem:[%s307 + $0x10] sm:$0xff]
          %v751 = vld [vmem:[%s307 + $0x18] sm:$0xff]
          %v752 = vld [vmem:[%s307 + $0x20] sm:$0xff]
          %v753 = vld [vmem:[%s307 + $0x28] sm:$0xff]
          %v754 = vld [vmem:[%s307 + $0x30] sm:$0xff]
          %v755 = vld [vmem:[%s307 + $0x38] sm:$0xff]
          %v756 = vld [vmem:[%s307 + $0x40] sm:$0xff]
          %v757 = vld [vmem:[%s307 + $0x48] sm:$0xff]
          %v758 = vld [vmem:[%s307 + $0x50] sm:$0xff]
          %v759 = vld [vmem:[%s307 + $0x58] sm:$0xff]
          %v760 = vld [vmem:[%s307 + $0x60] sm:$0xff]
          %v761 = vld [vmem:[%s307 + $0x68] sm:$0xff]
          %v762 = vld [vmem:[%s307 + $0x70] sm:$0xff]
          %v763 = vld [vmem:[%s307 + $0x78] sm:$0xff]
          %764 = vmatprep.subr.mxu0 0.0
          %765 = vmatpush1.msra.mxu0 %v748
          %766 = vmatprep.subr.mxu0 0.0
          %767 = vmatpush1.msra.mxu0 %v749
          %768 = vmatprep.subr.mxu0 0.0
          %769 = vmatpush1.msra.mxu0 %v750
          %770 = vmatprep.subr.mxu0 0.0
          %771 = vmatpush1.msra.mxu0 %v751
          %772 = vmatprep.subr.mxu0 0.0
          %773 = vmatpush1.msra.mxu0 %v752
          %774 = vmatprep.subr.mxu0 0.0
          %775 = vmatpush1.msra.mxu0 %v753
          %776 = vmatprep.subr.mxu0 0.0
          %777 = vmatpush1.msra.mxu0 %v754
          %778 = vmatprep.subr.mxu0 0.0
          %779 = vmatpush1.msra.mxu0 %v755
          %780 = vmatprep.subr.mxu0 0.0
          %781 = vmatpush1.msra.mxu0 %v756
          %782 = vmatprep.subr.mxu0 0.0
          %783 = vmatpush1.msra.mxu0 %v757
          %784 = vmatprep.subr.mxu0 0.0
          %785 = vmatpush1.msra.mxu0 %v758
          %786 = vmatprep.subr.mxu0 0.0
          %787 = vmatpush1.msra.mxu0 %v759
          %788 = vmatprep.subr.mxu0 0.0
          %789 = vmatpush1.msra.mxu0 %v760
          %790 = vmatprep.subr.mxu0 0.0
          %791 = vmatpush1.msra.mxu0 %v761
          %792 = vmatprep.subr.mxu0 0.0
          %793 = vmatpush1.msra.mxu0 %v762
          %794 = vmatprep.subr.mxu0 0.0
          %795 = vmatpush1.msra.mxu0 %v763
          %796 = vmatprep.subr.mxu0 0.0
          %797 = vmatpush1.msra.mxu0 0.0
          %798 = vmatprep.subr.mxu0 0.0
          %799 = vmatpush1.msra.mxu0 0.0
          %800 = vmatprep.subr.mxu0 0.0
          %801 = vmatpush1.msra.mxu0 0.0
          %802 = vmatprep.subr.mxu0 0.0
          %803 = vmatpush1.msra.mxu0 0.0
          %804 = vmatprep.subr.mxu0 0.0
          %805 = vmatpush1.msra.mxu0 0.0
          %806 = vmatprep.subr.mxu0 0.0
          %807 = vmatpush1.msra.mxu0 0.0
          %808 = vmatprep.subr.mxu0 0.0
          %809 = vmatpush1.msra.mxu0 0.0
          %810 = vmatprep.subr.mxu0 0.0
          %811 = vmatpush1.msra.mxu0 0.0
          %812 = vmatprep.subr.mxu0 0.0
          %813 = vmatpush1.msra.mxu0 0.0
          %814 = vmatprep.subr.mxu0 0.0
          %815 = vmatpush1.msra.mxu0 0.0
          %816 = vmatprep.subr.mxu0 0.0
          %817 = vmatpush1.msra.mxu0 0.0
          %818 = vmatprep.subr.mxu0 0.0
          %819 = vmatpush1.msra.mxu0 0.0
          %820 = vmatprep.subr.mxu0 0.0
          %821 = vmatpush1.msra.mxu0 0.0
          %822 = vmatprep.subr.mxu0 0.0
          %823 = vmatpush1.msra.mxu0 0.0
          %824 = vmatprep.subr.mxu0 0.0
          %825 = vmatpush1.msra.mxu0 0.0
          %826 = vmatprep.subr.mxu0 0.0
          %827 = vmatpush1.msra.mxu0 0.0
          %828 = vmatprep.mubr.f32.mxu0 0.0
          %829 = vmatmul.mubr.f32.gmra.mrb[0].mxu0 %v732
          %v830 = vpop.f32.mrb[0].mxu0
          %v831 = vadd.f32 0.0, %v830
          %v832 = vpop.f32.mrb[0].mxu0
          %833 = vmatprep.mubr.f32.mxu0 0.0
          %834 = vmatmul.mubr.f32.gmra.mrb[0].mxu0 %v733
          %v835 = vpop.f32.mrb[0].mxu0
          %v836 = vadd.f32 0.0, %v835
          %v837 = vpop.f32.mrb[0].mxu0
          %838 = vmatprep.mubr.f32.mxu0 0.0
          %839 = vmatmul.mubr.f32.gmra.mrb[0].mxu0 %v734
          %v840 = vpop.f32.mrb[0].mxu0
          %v841 = vadd.f32 0.0, %v840
          %v842 = vpop.f32.mrb[0].mxu0
          %843 = vmatprep.mubr.f32.mxu0 0.0
          %844 = vmatmul.mubr.f32.gmra.mrb[0].mxu0 %v735
          %v845 = vpop.f32.mrb[0].mxu0
          %v846 = vadd.f32 0.0, %v845
          %v847 = vpop.f32.mrb[0].mxu0
          %848 = vmatprep.mubr.f32.mxu0 0.0
          %849 = vmatmul.mubr.f32.gmra.mrb[0].mxu0 %v736
          %v850 = vpop.f32.mrb[0].mxu0
          %v851 = vadd.f32 0.0, %v850
          %v852 = vpop.f32.mrb[0].mxu0
          %853 = vmatprep.mubr.f32.mxu0 0.0
          %854 = vmatmul.mubr.f32.gmra.mrb[0].mxu0 %v737
          %v855 = vpop.f32.mrb[0].mxu0
          %v856 = vadd.f32 0.0, %v855
          %v857 = vpop.f32.mrb[0].mxu0
          %858 = vmatprep.mubr.f32.mxu0 0.0
          %859 = vmatmul.mubr.f32.gmra.mrb[0].mxu0 %v738
          %v860 = vpop.f32.mrb[0].mxu0
          %v861 = vadd.f32 0.0, %v860
          %v862 = vpop.f32.mrb[0].mxu0
          %863 = vmatprep.mubr.f32.mxu0 0.0
          %864 = vmatmul.mubr.f32.gmra.mrb[0].mxu0 %v739
          %v865 = vpop.f32.mrb[0].mxu0
          %v866 = vadd.f32 0.0, %v865
          %v867 = vpop.f32.mrb[0].mxu0
          %868 = vmatprep.mubr.f32.mxu0 0.0
          %869 = vmatmul.mubr.f32.gmra.mrb[0].mxu0 %v740
          %v870 = vpop.f32.mrb[0].mxu0
          %v871 = vadd.f32 0.0, %v870
          %v872 = vpop.f32.mrb[0].mxu0
          %873 = vmatprep.mubr.f32.mxu0 0.0
          %874 = vmatmul.mubr.f32.gmra.mrb[0].mxu0 %v741
          %v875 = vpop.f32.mrb[0].mxu0
          %v876 = vadd.f32 0.0, %v875
          %v877 = vpop.f32.mrb[0].mxu0
          %878 = vmatprep.mubr.f32.mxu0 0.0
          %879 = vmatmul.mubr.f32.gmra.mrb[0].mxu0 %v742
          %v880 = vpop.f32.mrb[0].mxu0
          %v881 = vadd.f32 0.0, %v880
          %v882 = vpop.f32.mrb[0].mxu0
          %883 = vmatprep.mubr.f32.mxu0 0.0
          %884 = vmatmul.mubr.f32.gmra.mrb[0].mxu0 %v743
          %v885 = vpop.f32.mrb[0].mxu0
          %v886 = vadd.f32 0.0, %v885
          %v887 = vpop.f32.mrb[0].mxu0
          %888 = vmatprep.mubr.f32.mxu0 0.0
          %889 = vmatmul.mubr.f32.gmra.mrb[0].mxu0 %v744
          %v890 = vpop.f32.mrb[0].mxu0
          %v891 = vadd.f32 0.0, %v890
          %v892 = vpop.f32.mrb[0].mxu0
          %893 = vmatprep.mubr.f32.mxu0 0.0
          %894 = vmatmul.mubr.f32.gmra.mrb[0].mxu0 %v745
          %v895 = vpop.f32.mrb[0].mxu0
          %v896 = vadd.f32 0.0, %v895
          %v897 = vpop.f32.mrb[0].mxu0
          %898 = vmatprep.mubr.f32.mxu0 0.0
          %899 = vmatmul.mubr.f32.gmra.mrb[0].mxu0 %v746
          %v900 = vpop.f32.mrb[0].mxu0
          %v901 = vadd.f32 0.0, %v900
          %v902 = vpop.f32.mrb[0].mxu0
          %903 = vmatprep.mubr.f32.mxu0 0.0
          %904 = vmatmul.mubr.f32.gmra.mrb[0].mxu0 %v747
          %v905 = vpop.f32.mrb[0].mxu0
          %v906 = vadd.f32 0.0, %v905
          %v907 = vpop.f32.mrb[0].mxu0
          %908 = vdwg.mxu0
          %v909 = vadd.f32 %v716, %v831
          %v910 = vadd.f32 %v717, %v836
          %v911 = vadd.f32 %v718, %v841
          %v912 = vadd.f32 %v719, %v846
          %v913 = vadd.f32 %v720, %v851
          %v914 = vadd.f32 %v721, %v856
          %v915 = vadd.f32 %v722, %v861
          %v916 = vadd.f32 %v723, %v866
          %v917 = vadd.f32 %v724, %v871
          %v918 = vadd.f32 %v725, %v876
          %v919 = vadd.f32 %v726, %v881
          %v920 = vadd.f32 %v727, %v886
          %v921 = vadd.f32 %v728, %v891
          %v922 = vadd.f32 %v729, %v896
          %v923 = vadd.f32 %v730, %v901
          %v924 = vadd.f32 %v731, %v906
          %925 = vst [vmem:[#allocation11] sm:$0xff] %v909
          %926 = vst [vmem:[#allocation11 + $0x8] sm:$0xff] %v910
          %927 = vst [vmem:[#allocation11 + $0x10] sm:$0xff] %v911
          %928 = vst [vmem:[#allocation11 + $0x18] sm:$0xff] %v912
          %929 = vst [vmem:[#allocation11 + $0x20] sm:$0xff] %v913
          %930 = vst [vmem:[#allocation11 + $0x28] sm:$0xff] %v914
          %931 = vst [vmem:[#allocation11 + $0x30] sm:$0xff] %v915
          %932 = vst [vmem:[#allocation11 + $0x38] sm:$0xff] %v916
          %933 = vst [vmem:[#allocation11 + $0x40] sm:$0xff] %v917
          %934 = vst [vmem:[#allocation11 + $0x48] sm:$0xff] %v918
          %935 = vst [vmem:[#allocation11 + $0x50] sm:$0xff] %v919
          %936 = vst [vmem:[#allocation11 + $0x58] sm:$0xff] %v920
          %937 = vst [vmem:[#allocation11 + $0x60] sm:$0xff] %v921
          %938 = vst [vmem:[#allocation11 + $0x68] sm:$0xff] %v922
          %939 = vst [vmem:[#allocation11 + $0x70] sm:$0xff] %v923
          %940 = vst [vmem:[#allocation11 + $0x78] sm:$0xff] %v924
        $region68: #{tpu_custom_call.1} parent=39 // pred_fallthru
          _
        %p941 = scmp.eq.s32.totalorder %s28, 2
        %p942 = pnand %p941, %p335
        %p943 = pneg %p942
        // Predicated region
        $region69: #{tpu_custom_call.1} parent=39 // pred_check
          _
        $region70: #{tpu_custom_call.1} parent=39 // pred_check_branch
          %945 = sbr.rel (%p942) target = $region72
        $region71: #{tpu_custom_call.1} parent=39 // pred_region
          %v946 = vld [vmem:[#allocation11] sm:$0xff]
          %v947 = vld [vmem:[#allocation11 + $0x8] sm:$0xff]
          %v948 = vld [vmem:[#allocation11 + $0x10] sm:$0xff]
          %v949 = vld [vmem:[#allocation11 + $0x18] sm:$0xff]
          %v950 = vld [vmem:[#allocation11 + $0x20] sm:$0xff]
          %v951 = vld [vmem:[#allocation11 + $0x28] sm:$0xff]
          %v952 = vld [vmem:[#allocation11 + $0x30] sm:$0xff]
          %v953 = vld [vmem:[#allocation11 + $0x38] sm:$0xff]
          %v954 = vld [vmem:[#allocation11 + $0x40] sm:$0xff]
          %v955 = vld [vmem:[#allocation11 + $0x48] sm:$0xff]
          %v956 = vld [vmem:[#allocation11 + $0x50] sm:$0xff]
          %v957 = vld [vmem:[#allocation11 + $0x58] sm:$0xff]
          %v958 = vld [vmem:[#allocation11 + $0x60] sm:$0xff]
          %v959 = vld [vmem:[#allocation11 + $0x68] sm:$0xff]
          %v960 = vld [vmem:[#allocation11 + $0x70] sm:$0xff]
          %v961 = vld [vmem:[#allocation11 + $0x78] sm:$0xff]
          %v962 = vld [vmem:[%s4] sm:$0x1]
          %v964 = vlaneseq
          %v965 = vshrl.u32 %v964, 7
          %v966 = vsub.s32 0, %v965
          %v967 = vrot.slane %v962, %v966
          %v969 = vadd.f32 %v946, %v967
          %v970 = vadd.f32 %v947, %v967
          %v971 = vadd.f32 %v948, %v967
          %v972 = vadd.f32 %v949, %v967
          %v973 = vadd.f32 %v950, %v967
          %v974 = vadd.f32 %v951, %v967
          %v975 = vadd.f32 %v952, %v967
          %v976 = vadd.f32 %v953, %v967
          %v977 = vadd.f32 %v954, %v967
          %v978 = vadd.f32 %v955, %v967
          %v979 = vadd.f32 %v956, %v967
          %v980 = vadd.f32 %v957, %v967
          %v981 = vadd.f32 %v958, %v967
          %v982 = vadd.f32 %v959, %v967
          %v983 = vadd.f32 %v960, %v967
          %v984 = vadd.f32 %v961, %v967
          %v985 = vmax.f32 %v969, 0.0
          %v986 = vmax.f32 %v970, 0.0
          %v987 = vmax.f32 %v971, 0.0
          %v988 = vmax.f32 %v972, 0.0
          %v989 = vmax.f32 %v973, 0.0
          %v990 = vmax.f32 %v974, 0.0
          %v991 = vmax.f32 %v975, 0.0
          %v992 = vmax.f32 %v976, 0.0
          %v993 = vmax.f32 %v977, 0.0
          %v994 = vmax.f32 %v978, 0.0
          %v995 = vmax.f32 %v979, 0.0
          %v996 = vmax.f32 %v980, 0.0
          %v997 = vmax.f32 %v981, 0.0
          %v998 = vmax.f32 %v982, 0.0
          %v999 = vmax.f32 %v983, 0.0
          %v1000 = vmax.f32 %v984, 0.0
          %1001 = vst [vmem:[#allocation11] sm:$0xff] %v985
          %1002 = vst [vmem:[#allocation11 + $0x8] sm:$0xff] %v986
          %1003 = vst [vmem:[#allocation11 + $0x10] sm:$0xff] %v987
          %1004 = vst [vmem:[#allocation11 + $0x18] sm:$0xff] %v988
          %1005 = vst [vmem:[#allocation11 + $0x20] sm:$0xff] %v989
          %1006 = vst [vmem:[#allocation11 + $0x28] sm:$0xff] %v990
          %1007 = vst [vmem:[#allocation11 + $0x30] sm:$0xff] %v991
          %1008 = vst [vmem:[#allocation11 + $0x38] sm:$0xff] %v992
          %1009 = vst [vmem:[#allocation11 + $0x40] sm:$0xff] %v993
          %1010 = vst [vmem:[#allocation11 + $0x48] sm:$0xff] %v994
          %1011 = vst [vmem:[#allocation11 + $0x50] sm:$0xff] %v995
          %1012 = vst [vmem:[#allocation11 + $0x58] sm:$0xff] %v996
          %1013 = vst [vmem:[#allocation11 + $0x60] sm:$0xff] %v997
          %1014 = vst [vmem:[#allocation11 + $0x68] sm:$0xff] %v998
          %1015 = vst [vmem:[#allocation11 + $0x70] sm:$0xff] %v999
          %1016 = vst [vmem:[#allocation11 + $0x78] sm:$0xff] %v1000
        $region72: #{tpu_custom_call.1} parent=39 // pred_fallthru
          _
        // Predicated region
        $region73: #{tpu_custom_call.1} parent=39 // pred_check
          %p1017 = pneg %p188
        $region74: #{tpu_custom_call.1} parent=39 // pred_check_branch
          %1019 = sbr.rel (%p1017) target = $region76
        $region75: #{tpu_custom_call.1} parent=39 // pred_region
          %s1020 = smul.u32 16, %s27
          %s1022 = ssub.s32 2048, 2048
          %1023 = vsyncadd [#allocation5], %s1022
          %s1024 = smul.addr %s1020, 128
          %s1025 = scalar_lea.hbm %s5, %s1024
          %s1026 = sshll.u32 [#allocation11], 4
          %s1027 = int_to_ptr.vmem [resolvable:$true] %s1026
          %1032 = dma.vmem_to_hbm [thread:$0]  %s1027, 2048, %s1025, [#allocation5], 128, 128, 8
        $region76: #{tpu_custom_call.1} parent=39 // pred_fallthru
          _
        // Predicated region
        $region77: #{tpu_custom_call.1} parent=39 // pred_check
          %p1033 = pneg %p188
        $region78: #{tpu_custom_call.1} parent=39 // pred_check_branch
          %1035 = sbr.rel (%p1033) target = $region80
        $region79: #{tpu_custom_call.1} parent=39 // pred_region
          %1036 = dma.done [#allocation5], 2048
        $region80: #{tpu_custom_call.1} parent=39 // pred_fallthru
          _
      $region40: #{tpu_custom_call.1} parent=5 // pred_fallthru
        _
      %p1037 = scmp.le.s32.totalorder 2, %s17
      // Predicated region
      $region81: #{tpu_custom_call.1} parent=5 // pred_check
        %p1038 = pneg %p1037
      $region82: #{tpu_custom_call.1} parent=5 // pred_check_branch
        %1040 = sbr.rel (%p1038) target = $region84
      $region83: #{tpu_custom_call.1} parent=5 // pred_region
        %s1041 = ssub.s32 %s17, 2
      $region84: #{tpu_custom_call.1} parent=5 // pred_fallthru
        _
    $region6: #{tpu_custom_call.1} parent=1 // loop_footer
      %s21 = sadd.s32 1, %s17
    $region7: #{tpu_custom_call.1} parent=1 // loop_footer_branch
      %16 = sbr.rel target = $region3
    $region8: #{tpu_custom_call.1} parent=1 // loop_exit
      _
    %1042 = vsyncpa [#allocation4], 1
    %s1043 = scalar_lea.sflag [#allocation4], 1
    %1044 = vsyncpa %s1043, 1
    %1045 = vsyncpa [#allocation7], 1
    %1046 = vsyncpa [#allocation10], 1
    %s1047 = scalar_lea.sflag [#allocation10], 1
    %1048 = vsyncpa %s1047, 1
    %1049 = vsyncpa [#allocation5], 1
    %s1050 = scalar_lea.sflag [#allocation5], 1
    %1051 = vsyncpa %s1050, 1

</llo_original>
